<compile_context>
chip_gen: v6e
topology: v6e:2x2x1
jax: 0.10.0
libtpu: 0.0.40
codegen_flags: <defaults>
</compile_context>

<pallas_src>
import math

import jax
import jax.numpy as jnp
from jax import lax
from jax.experimental import pallas as pl
from jax.experimental.pallas import tpu as pltpu


def _round_up(x, m):
    return ((x + m - 1) // m) * m


def sae_forward_kernel(x_ref, we_ref, be_ref, wd_ref, bd_ref,
                       out_ref, act_ref, acc_ref):
    """One (batch-tile i, hidden-tile k) grid step.

    x_ref  : (TB, D)  bf16 input tile (VMEM-resident across the k axis)
    we_ref : (TH, D)  bf16 encoder weight rows   (PyTorch layout slice of (H, D))
    be_ref : (1, TH)  f32 encoder bias slice
    wd_ref : (D, TH)  bf16 decoder weight cols   (PyTorch layout slice of (D, H))
    bd_ref : (1, D)   f32 decoder bias
    out_ref: (TB, D)  f32 reconstruction (written only at the last k)
    act_ref: (TB, TH) f32 hidden activation tile
    acc_ref: (TB, D)  f32 decoder accumulator (scratch)
    """
    k = pl.program_id(1)

    @pl.when(k == 0)
    def _():
        acc_ref[...] = jnp.zeros_like(acc_ref)

    # Encoder slice: h = x @ W_enc[k*TH:(k+1)*TH, :].T   (contract over D)
    h = lax.dot_general(
        x_ref[...], we_ref[...],
        dimension_numbers=(((1,), (1,)), ((), ())),
        preferred_element_type=jnp.float32)
    act = jax.nn.sigmoid(h + be_ref[...])                 # (TB, TH) f32
    act_ref[...] = act.astype(act_ref.dtype)

    # Decoder partial sum: acc += act @ W_dec[:, k*TH:(k+1)*TH].T  (contract over TH)
    acc_ref[...] += lax.dot_general(
        act.astype(wd_ref.dtype), wd_ref[...],
        dimension_numbers=(((1,), (1,)), ((), ())),
        preferred_element_type=jnp.float32)

    @pl.when(k == pl.num_programs(1) - 1)
    def _():
        out_ref[...] = jax.nn.sigmoid(
            acc_ref[...] + bd_ref[...]).astype(out_ref.dtype)


def sparse_autoencoder_forward(x, w_enc, b_enc, w_dec, b_dec,
                               *, block_b=256, block_h=512):
    """Fused SAE forward.

    x     : (B, input_size)               float32 (or castable)
    w_enc : (hidden_size, input_size)     PyTorch nn.Linear weight layout
    b_enc : (hidden_size,)
    w_dec : (input_size, hidden_size)
    b_dec : (input_size,)
    Returns (output (B, input_size) f32, activation (B, hidden_size) f32).
    """
    B, D = x.shape
    H = w_enc.shape[0]
    assert w_enc.shape == (H, D) and w_dec.shape == (D, H)
    assert b_enc.shape == (H,) and b_dec.shape == (D,)

    # --- tile sizes --------------------------------------------------------
    TB = min(block_b, _round_up(B, 8))          # batch tile (>=8, <=block_b)
    TH = block_h if (H % block_h == 0) else H   # hidden (K) tile, fall back to full H
    Bp = _round_up(B, TB)                       # padded batch

    # --- operands: bf16 matmul inputs, f32 biases, native layouts ----------
    x_p = x.astype(jnp.bfloat16)
    if Bp != B:
        x_p = jnp.pad(x_p, ((0, Bp - B), (0, 0)))
    we = w_enc.astype(jnp.bfloat16)             # (H, D), no transpose
    wd = w_dec.astype(jnp.bfloat16)             # (D, H), no transpose
    be = b_enc.reshape(1, H).astype(jnp.float32)
    bd = b_dec.reshape(1, D).astype(jnp.float32)

    grid = (Bp // TB, H // TH)

    # --- VMEM budget: double-buffered tiles + accumulator + headroom -------
    tile_bytes = (
        2 * TB * D * 2          # x (bf16)
        + 2 * TH * D * 2        # W_enc slab (bf16)
        + 2 * TH * 4            # b_enc slice
        + 2 * D * TH * 2        # W_dec slab (bf16)
        + 2 * D * 4             # b_dec
        + 2 * TB * D * 4        # out (f32)
        + 2 * TB * TH * 4       # act (f32)
        + TB * D * 4            # accumulator scratch
    )
    vmem_limit = min(tile_bytes + (16 << 20), 56 << 20)   # stay under v7x 64 MiB

    cost = pl.CostEstimate(
        flops=4 * Bp * D * H,                   # two matmuls, 2*M*N*K each
        transcendentals=Bp * (H + D),           # sigmoids
        bytes_accessed=(x_p.size * 2 + we.size * 2 + wd.size * 2
                        + be.size * 4 + bd.size * 4
                        + Bp * D * 4 + Bp * H * 4),
    )

    grid_spec = pltpu.PrefetchScalarGridSpec(
        num_scalar_prefetch=0,
        grid=grid,
        in_specs=[
            pl.BlockSpec((TB, D), lambda i, k: (i, 0)),    # x: resident across k
            pl.BlockSpec((TH, D), lambda i, k: (k, 0)),    # W_enc row slab
            pl.BlockSpec((1, TH), lambda i, k: (0, k)),    # b_enc slice
            pl.BlockSpec((D, TH), lambda i, k: (0, k)),    # W_dec col slab
            pl.BlockSpec((1, D), lambda i, k: (0, 0)),     # b_dec
        ],
        out_specs=(
            pl.BlockSpec((TB, D), lambda i, k: (i, 0)),    # out (accumulated over k)
            pl.BlockSpec((TB, TH), lambda i, k: (i, k)),   # act
        ),
        scratch_shapes=[pltpu.VMEM((TB, D), jnp.float32)],
    )

    out, act = pl.pallas_call(
        sae_forward_kernel,
        out_shape=(
            jax.ShapeDtypeStruct((Bp, D), jnp.float32),
            jax.ShapeDtypeStruct((Bp, H), jnp.float32),
        ),
        grid_spec=grid_spec,
        compiler_params=pltpu.CompilerParams(
            dimension_semantics=("parallel", "arbitrary"),
            vmem_limit_bytes=vmem_limit,
        ),
        cost_estimate=cost,
    )(x_p, we, be, wd, bd)

    if Bp != B:
        out = out[:B]
        act = act[:B]
    return out, act


def init_linear_params(key, out_features, in_features):
    """Deterministic init mimicking PyTorch nn.Linear default (uniform +/- 1/sqrt(fan_in))."""
    kw, kb = jax.random.split(key)
    bound = 1.0 / math.sqrt(in_features)
    w = jax.random.uniform(kw, (out_features, in_features), jnp.float32,
                           minval=-bound, maxval=bound)
    b = jax.random.uniform(kb, (out_features,), jnp.float32,
                           minval=-bound, maxval=bound)
    return w, b


if __name__ == "__main__":
    # Small shapes consistent with the module: x is (batch, input_size).
    batch = 8
    input_size = 256
    hidden_size = 128

    key = jax.random.PRNGKey(0)
    k_x, k_enc, k_dec = jax.random.split(key, 3)

    x = jax.random.normal(k_x, (batch, input_size), jnp.float32)
    w_enc, b_enc = init_linear_params(k_enc, hidden_size, input_size)
    w_dec, b_dec = init_linear_params(k_dec, input_size, hidden_size)

    out, act = sparse_autoencoder_forward(x, w_enc, b_enc, w_dec, b_dec)
    jax.block_until_ready((out, act))

    # Pure-JAX f32 reference of the forward semantics.
    act_ref = jax.nn.sigmoid(x @ w_enc.T + b_enc)
    out_ref = jax.nn.sigmoid(act_ref @ w_dec.T + b_dec)

    assert out.shape == (batch, input_size) and act.shape == (batch, hidden_size)
    # bf16 matmuls (f32 accumulation) -> loosened tolerance vs the f32 reference;
    # sigmoid outputs are bounded in [0, 1] so absolute tolerance is meaningful.
    assert jnp.allclose(act, act_ref, atol=2e-2), "activation mismatch"
    assert jnp.allclose(out, out_ref, atol=2e-2), "output mismatch"

    print("KERNEL_OK")
</pallas_src>

<mosaic_0001>
module attributes {stable_mosaic.version = 11 : i64} {
  func.func @sae_forward_kernel(%arg0: i32, %arg1: i32, %arg2: memref<8x256xbf16, #tpu.memory_space<vmem>>, %arg3: memref<128x256xbf16, #tpu.memory_space<vmem>>, %arg4: memref<1x128xf32, #tpu.memory_space<vmem>>, %arg5: memref<256x128xbf16, #tpu.memory_space<vmem>>, %arg6: memref<1x256xf32, #tpu.memory_space<vmem>>, %arg7: memref<8x256xf32, #tpu.memory_space<vmem>>, %arg8: memref<8x128xf32, #tpu.memory_space<vmem>>, %arg9: memref<8x256xf32, #tpu.memory_space<vmem>>) attributes {dimension_semantics = [#tpu.dimension_semantics<parallel>, #tpu.dimension_semantics<arbitrary>], iteration_bounds = array<i64: 1, 1>, scalar_prefetch = 0 : i64, scratch_operands = 1 : i64, tpu.core_type = #tpu.core_type<tc>, window_params = [{transform_indices = @transform_0, window_bounds = array<i64: 8, 256>}, {transform_indices = @transform_1, window_bounds = array<i64: 128, 256>}, {transform_indices = @transform_2, window_bounds = array<i64: 1, 128>}, {transform_indices = @transform_3, window_bounds = array<i64: 256, 128>}, {pipeline_mode = #tpu.pipeline_mode<synchronous>, transform_indices = @transform_4, window_bounds = array<i64: 1, 256>}, {transform_indices = @transform_5, window_bounds = array<i64: 8, 256>}, {transform_indices = @transform_6, window_bounds = array<i64: 8, 128>}]} {
    %c0_i32 = arith.constant 0 : i32
    %0 = arith.cmpi eq, %arg1, %c0_i32 : i32
    %1 = arith.extui %0 : i1 to i32
    %c0_i32_0 = arith.constant 0 : i32
    %2 = arith.cmpi ne, %1, %c0_i32_0 : i32
    scf.if %2 {
      %cst_18 = arith.constant 0.000000e+00 : f32
      %24 = vector.broadcast %cst_18 : f32 to vector<8x256xf32>
      %c0_19 = arith.constant 0 : index
      %c0_20 = arith.constant 0 : index
      %25 = vector.load %arg9[%c0_19, %c0_20] : memref<8x256xf32, #tpu.memory_space<vmem>>, vector<8x256xf32>
      tpu.vector_store %arg9[%c0_19, %c0_20], %24 {strides = array<i32>} : memref<8x256xf32, #tpu.memory_space<vmem>>, vector<8x256xf32>,
    } else {
    }
    %c0 = arith.constant 0 : index
    %c0_1 = arith.constant 0 : index
    %3 = vector.load %arg2[%c0, %c0_1] : memref<8x256xbf16, #tpu.memory_space<vmem>>, vector<8x256xbf16>
    %c0_2 = arith.constant 0 : index
    %c0_3 = arith.constant 0 : index
    %4 = vector.load %arg3[%c0_2, %c0_3] : memref<128x256xbf16, #tpu.memory_space<vmem>>, vector<128x256xbf16>
    %cst = arith.constant dense<0.000000e+00> : vector<8x128xf32>
    %5 = tpu.matmul %3, %4, %cst {dimension_numbers = #tpu.dot_dimension_numbers<[1], [1], [0], [0], [0, 0, 1, 0], [], []>} : vector<8x256xbf16>, vector<128x256xbf16>, vector<8x128xf32> -> vector<8x128xf32>
    %c0_4 = arith.constant 0 : index
    %c0_5 = arith.constant 0 : index
    %6 = vector.load %arg4[%c0_4, %c0_5] : memref<1x128xf32, #tpu.memory_space<vmem>>, vector<1x128xf32>
    %7 = vector.broadcast %6 : vector<1x128xf32> to vector<8x128xf32>
    %8 = arith.addf %5, %7 : vector<8x128xf32>
    %9 = arith.negf %8 : vector<8x128xf32>
    %10 = math.exp %9 : vector<8x128xf32>
    %cst_6 = arith.constant 1.000000e+00 : f32
    %11 = vector.broadcast %cst_6 : f32 to vector<8x128xf32>
    %12 = arith.addf %11, %10 : vector<8x128xf32>
    %13 = arith.divf %11, %12 : vector<8x128xf32>
    %c0_7 = arith.constant 0 : index
    %c0_8 = arith.constant 0 : index
    %14 = vector.load %arg8[%c0_7, %c0_8] : memref<8x128xf32, #tpu.memory_space<vmem>>, vector<8x128xf32>
    tpu.vector_store %arg8[%c0_7, %c0_8], %13 {strides = array<i32>} : memref<8x128xf32, #tpu.memory_space<vmem>>, vector<8x128xf32>,
    %c0_9 = arith.constant 0 : index
    %c0_10 = arith.constant 0 : index
    %15 = vector.load %arg9[%c0_9, %c0_10] : memref<8x256xf32, #tpu.memory_space<vmem>>, vector<8x256xf32>
    %16 = arith.truncf %13 : vector<8x128xf32> to vector<8x128xbf16>
    %c0_11 = arith.constant 0 : index
    %c0_12 = arith.constant 0 : index
    %17 = vector.load %arg5[%c0_11, %c0_12] : memref<256x128xbf16, #tpu.memory_space<vmem>>, vector<256x128xbf16>
    %cst_13 = arith.constant dense<0.000000e+00> : vector<8x256xf32>
    %18 = tpu.matmul %16, %17, %cst_13 {dimension_numbers = #tpu.dot_dimension_numbers<[1], [1], [0], [0], [0, 0, 1, 0], [], []>} : vector<8x128xbf16>, vector<256x128xbf16>, vector<8x256xf32> -> vector<8x256xf32>
    %19 = arith.addf %15, %18 : vector<8x256xf32>
    %c0_14 = arith.constant 0 : index
    %c0_15 = arith.constant 0 : index
    %20 = vector.load %arg9[%c0_14, %c0_15] : memref<8x256xf32, #tpu.memory_space<vmem>>, vector<8x256xf32>
    tpu.vector_store %arg9[%c0_14, %c0_15], %19 {strides = array<i32>} : memref<8x256xf32, #tpu.memory_space<vmem>>, vector<8x256xf32>,
    %c0_i32_16 = arith.constant 0 : i32
    %21 = arith.cmpi eq, %arg1, %c0_i32_16 : i32
    %22 = arith.extui %21 : i1 to i32
    %c0_i32_17 = arith.constant 0 : i32
    %23 = arith.cmpi ne, %22, %c0_i32_17 : i32
    scf.if %23 {
      %c0_18 = arith.constant 0 : index
      %c0_19 = arith.constant 0 : index
      %24 = vector.load %arg9[%c0_18, %c0_19] : memref<8x256xf32, #tpu.memory_space<vmem>>, vector<8x256xf32>
      %c0_20 = arith.constant 0 : index
      %c0_21 = arith.constant 0 : index
      %25 = vector.load %arg6[%c0_20, %c0_21] : memref<1x256xf32, #tpu.memory_space<vmem>>, vector<1x256xf32>
      %26 = vector.broadcast %25 : vector<1x256xf32> to vector<8x256xf32>
      %27 = arith.addf %24, %26 : vector<8x256xf32>
      %28 = arith.negf %27 : vector<8x256xf32>
      %29 = math.exp %28 : vector<8x256xf32>
      %cst_22 = arith.constant 1.000000e+00 : f32
      %30 = vector.broadcast %cst_22 : f32 to vector<8x256xf32>
      %31 = arith.addf %30, %29 : vector<8x256xf32>
      %32 = arith.divf %30, %31 : vector<8x256xf32>
      %c0_23 = arith.constant 0 : index
      %c0_24 = arith.constant 0 : index
      %33 = vector.load %arg7[%c0_23, %c0_24] : memref<8x256xf32, #tpu.memory_space<vmem>>, vector<8x256xf32>
      tpu.vector_store %arg7[%c0_23, %c0_24], %32 {strides = array<i32>} : memref<8x256xf32, #tpu.memory_space<vmem>>, vector<8x256xf32>,
    } else {
    }
    return
  }
  func.func @transform_0(%arg0: i32, %arg1: i32) -> (i32, i32) {
    %c0_i32 = arith.constant 0 : i32
    %c0_i32_0 = arith.constant 0 : i32
    return %arg0, %c0_i32 : i32, i32
  }
  func.func @transform_1(%arg0: i32, %arg1: i32) -> (i32, i32) {
    %c0_i32 = arith.constant 0 : i32
    %c0_i32_0 = arith.constant 0 : i32
    return %arg1, %c0_i32 : i32, i32
  }
  func.func @transform_2(%arg0: i32, %arg1: i32) -> (i32, i32) {
    %c0_i32 = arith.constant 0 : i32
    %c0_i32_0 = arith.constant 0 : i32
    return %c0_i32, %arg1 : i32, i32
  }
  func.func @transform_3(%arg0: i32, %arg1: i32) -> (i32, i32) {
    %c0_i32 = arith.constant 0 : i32
    %c0_i32_0 = arith.constant 0 : i32
    return %c0_i32, %arg1 : i32, i32
  }
  func.func @transform_4(%arg0: i32, %arg1: i32) -> (i32, i32) {
    %c0_i32 = arith.constant 0 : i32
    %c0_i32_0 = arith.constant 0 : i32
    %c0_i32_1 = arith.constant 0 : i32
    return %c0_i32, %c0_i32_0 : i32, i32
  }
  func.func @transform_5(%arg0: i32, %arg1: i32) -> (i32, i32) {
    %c0_i32 = arith.constant 0 : i32
    %c0_i32_0 = arith.constant 0 : i32
    return %arg0, %c0_i32 : i32, i32
  }
  func.func @transform_6(%arg0: i32, %arg1: i32) -> (i32, i32) {
    %c0_i32 = arith.constant 0 : i32
    return %arg0, %arg1 : i32, i32
  }
}

</mosaic_0001>

<llo_original>
// kernel: tpu_custom_call.1
$region0: #{tpu_custom_call.1}
  #allocation0 [shape = 'u32[]', space=smem, size = 0x4, offset = 0x4, fixed_abs, tag = 'smem constant byte address 0x4 - core index']
  #allocation1 [shape = 'u32[144,128]{1,0:T(1,128)}', space=vmem, size = 0x12000, scoped, tag = 'internal scratch']
  #allocation2 [shape = 'f32[8,256]{1,0:T(8,128)}', space=vmem, size = 0x2000, scoped, tag = 'scratch operand']
  %s0 = inlined_call_operand.hbm [shape: bf16[8,256], index: 0, kind: input, shape index: {}]
  %s1 = inlined_call_operand.hbm [shape: bf16[128,256], index: 1, kind: input, shape index: {}]
  %s2 = inlined_call_operand.vmem [shape: f32[1,128], index: 2, kind: input, shape index: {}]
  %s3 = inlined_call_operand.hbm [shape: bf16[256,128], index: 3, kind: input, shape index: {}]
  %s4 = inlined_call_operand.vmem [shape: f32[1,256], index: 4, kind: input, shape index: {}]
  %s5 = inlined_call_operand.hbm [shape: f32[8,256], index: 5, kind: output, shape index: {0}]
  %s6 = inlined_call_operand.hbm [shape: f32[8,128], index: 6, kind: output, shape index: {1}]
  %7 = xla_tuple %s5, %s6
  %s8 = sld [smem:[#allocation0]]
  $region58: #{tpu_custom_call.1} parent=0
    _
  %s10 = ssub.s32 1, %s8
  %s11 = scalar_select 0, %s10, %s8
  $region1: #{tpu_custom_call.1} parent=0
    #allocation3 [shape = 'u8[4096]{0}', space=vmem, size = 0x1000, scoped, tag = 'input window, operand 0, single buffered']
    #allocation4 [shape = 's32[1]{0}', space=sflag, size = 0x4, scoped, tag = 'scoped memory for tpu_custom_call.1']
    #allocation5 [shape = 's32[1]{0}', space=sflag, size = 0x4, scoped, tag = 'scoped memory for tpu_custom_call.1']
    #allocation6 [shape = 'u8[65536]{0}', space=vmem, size = 0x10000, scoped, tag = 'input window, operand 1, single buffered']
    #allocation7 [shape = 's32[1]{0}', space=sflag, size = 0x4, scoped, tag = 'scoped memory for tpu_custom_call.1']
    #allocation8 [shape = 'u8[65536]{0}', space=vmem, size = 0x10000, scoped, tag = 'input window, operand 3, single buffered']
    #allocation9 [shape = 'u8[8192]{0}', space=vmem, size = 0x2000, scoped, tag = 'output window, operand 0, single buffered']
    #allocation10 [shape = 'u8[4096]{0}', space=vmem, size = 0x1000, scoped, tag = 'output window, operand 1, single buffered']
    #allocation11 [shape = 's32[1]{0}', space=sflag, size = 0x4, scoped, tag = 'scoped memory for tpu_custom_call.1']
    %12 = vsyncpa [#allocation4], 0
    %13 = vsyncpa [#allocation7], 0
    %14 = vsyncpa [#allocation5], 0
    %15 = vsyncpa [#allocation11], 0
    // Predicated region
    $region2: #{tpu_custom_call.1} parent=1 // pred_check
      _
    $region3: #{tpu_custom_call.1} parent=1 // pred_check_branch
      %17 = sbr.rel (0) target = $region5
    $region4: #{tpu_custom_call.1} parent=1 // pred_region
      %s19 = ssub.s32 128, 128
      %20 = vsyncadd [#allocation4], %s19
      %s22 = sshll.u32 [#allocation3], 4
      %s23 = int_to_ptr.vmem [resolvable:$true] %s22
      %25 = dma.hbm_to_vmem [thread:$0]  %s0, 128, %s23, [#allocation4]
    $region5: #{tpu_custom_call.1} parent=1 // pred_fallthru
      _
    // Predicated region
    $region6: #{tpu_custom_call.1} parent=1 // pred_check
      _
    $region7: #{tpu_custom_call.1} parent=1 // pred_check_branch
      %27 = sbr.rel (0) target = $region9
    $region8: #{tpu_custom_call.1} parent=1 // pred_region
      %s29 = ssub.s32 2048, 2048
      %30 = vsyncadd [#allocation7], %s29
      %s31 = sshll.u32 [#allocation6], 4
      %s32 = int_to_ptr.vmem [resolvable:$true] %s31
      %37 = dma.hbm_to_vmem [thread:$0]  %s1, 2048, %s32, [#allocation7], 128, 128, 8
    $region9: #{tpu_custom_call.1} parent=1 // pred_fallthru
      _
    // Predicated region
    $region10: #{tpu_custom_call.1} parent=1 // pred_check
      _
    $region11: #{tpu_custom_call.1} parent=1 // pred_check_branch
      %39 = sbr.rel (0) target = $region13
    $region12: #{tpu_custom_call.1} parent=1 // pred_region
      _
    $region13: #{tpu_custom_call.1} parent=1 // pred_fallthru
      _
    // Predicated region
    $region14: #{tpu_custom_call.1} parent=1 // pred_check
      _
    $region15: #{tpu_custom_call.1} parent=1 // pred_check_branch
      %41 = sbr.rel (0) target = $region17
    $region16: #{tpu_custom_call.1} parent=1 // pred_region
      %s43 = ssub.s32 2048, 2048
      %44 = vsyncadd [#allocation7], %s43
      %s45 = sshll.u32 [#allocation8], 4
      %s46 = int_to_ptr.vmem [resolvable:$true] %s45
      %51 = dma.hbm_to_vmem [thread:$0]  %s3, 2048, %s46, [#allocation7], 64, 64, 4
    $region17: #{tpu_custom_call.1} parent=1 // pred_fallthru
      _
    // Predicated region
    $region18: #{tpu_custom_call.1} parent=1 // pred_check
      _
    $region19: #{tpu_custom_call.1} parent=1 // pred_check_branch
      %53 = sbr.rel (0) target = $region21
    $region20: #{tpu_custom_call.1} parent=1 // pred_region
      _
    $region21: #{tpu_custom_call.1} parent=1 // pred_fallthru
      _
    // Predicated region
    $region22: #{tpu_custom_call.1} parent=1 // pred_check
      _
    $region23: #{tpu_custom_call.1} parent=1 // pred_check_branch
      %55 = sbr.rel (0) target = $region25
    $region24: #{tpu_custom_call.1} parent=1 // pred_region
      %56 = dma.done [#allocation4], 128
    $region25: #{tpu_custom_call.1} parent=1 // pred_fallthru
      _
    // Predicated region
    $region26: #{tpu_custom_call.1} parent=1 // pred_check
      _
    $region27: #{tpu_custom_call.1} parent=1 // pred_check_branch
      %58 = sbr.rel (0) target = $region29
    $region28: #{tpu_custom_call.1} parent=1 // pred_region
      %59 = dma.done [#allocation7], 2048
    $region29: #{tpu_custom_call.1} parent=1 // pred_fallthru
      _
    // Predicated region
    $region30: #{tpu_custom_call.1} parent=1 // pred_check
      _
    $region31: #{tpu_custom_call.1} parent=1 // pred_check_branch
      %61 = sbr.rel (0) target = $region33
    $region32: #{tpu_custom_call.1} parent=1 // pred_region
      %62 = dma.done [#allocation7], 2048
    $region33: #{tpu_custom_call.1} parent=1 // pred_fallthru
      _
    %p64 = scmp.eq.s32.totalorder 0, 0
    // Predicated region
    $region34: #{tpu_custom_call.1} parent=1 // pred_check
      %p65 = pneg %p64
    $region35: #{tpu_custom_call.1} parent=1 // pred_check_branch
      %67 = sbr.rel (%p65) target = $region37
    $region36: #{tpu_custom_call.1} parent=1 // pred_region
      %68 = vst [vmem:[#allocation2] sm:$0xff] 0.0
      %69 = vst [vmem:[#allocation2 + $0x8] sm:$0xff] 0.0
    $region37: #{tpu_custom_call.1} parent=1 // pred_fallthru
      _
    %v70 = vld [vmem:[#allocation3] sm:$0xff]
    %v71 = vld [vmem:[#allocation6] sm:$0xff]
    %v72 = vld [vmem:[#allocation6 + $0x8] sm:$0xff]
    %v73 = vld [vmem:[#allocation6 + $0x10] sm:$0xff]
    %v74 = vld [vmem:[#allocation6 + $0x18] sm:$0xff]
    %v75 = vld [vmem:[#allocation6 + $0x20] sm:$0xff]
    %v76 = vld [vmem:[#allocation6 + $0x28] sm:$0xff]
    %v77 = vld [vmem:[#allocation6 + $0x30] sm:$0xff]
    %v78 = vld [vmem:[#allocation6 + $0x38] sm:$0xff]
    %v79 = vld [vmem:[#allocation6 + $0x40] sm:$0xff]
    %v80 = vld [vmem:[#allocation6 + $0x48] sm:$0xff]
    %v81 = vld [vmem:[#allocation6 + $0x50] sm:$0xff]
    %v82 = vld [vmem:[#allocation6 + $0x58] sm:$0xff]
    %v83 = vld [vmem:[#allocation6 + $0x60] sm:$0xff]
    %v84 = vld [vmem:[#allocation6 + $0x68] sm:$0xff]
    %v85 = vld [vmem:[#allocation6 + $0x70] sm:$0xff]
    %v86 = vld [vmem:[#allocation6 + $0x78] sm:$0xff]
    %v87 = vld [vmem:[%s2] sm:$0x1]
    %v89 = vlaneseq
    %v90 = vshrl.u32 %v89, 7
    %v91 = vsub.s32 0, %v90
    %v92 = vrot.slane %v87, %v91
    %v95 = vunpack.c.l.b16 %v70
    %v96 = vunpack.c.h.b16 %v70
    %v97 = vpack.c.b16 %v95, %v95
    %v98 = vpack.c.b16 %v96, %v96
    %v117 = vunpack.c.l.b16 %v71
    %v118 = vunpack.c.h.b16 %v71
    %v119 = vunpack.c.l.b16 %v72
    %v120 = vunpack.c.h.b16 %v72
    %v121 = vunpack.c.l.b16 %v73
    %v122 = vunpack.c.h.b16 %v73
    %v123 = vunpack.c.l.b16 %v74
    %v124 = vunpack.c.h.b16 %v74
    %v125 = vunpack.c.l.b16 %v75
    %v126 = vunpack.c.h.b16 %v75
    %v127 = vunpack.c.l.b16 %v76
    %v128 = vunpack.c.h.b16 %v76
    %v129 = vunpack.c.l.b16 %v77
    %v130 = vunpack.c.h.b16 %v77
    %v131 = vunpack.c.l.b16 %v78
    %v132 = vunpack.c.h.b16 %v78
    %v133 = vunpack.c.l.b16 %v79
    %v134 = vunpack.c.h.b16 %v79
    %v135 = vunpack.c.l.b16 %v80
    %v136 = vunpack.c.h.b16 %v80
    %v137 = vunpack.c.l.b16 %v81
    %v138 = vunpack.c.h.b16 %v81
    %v139 = vunpack.c.l.b16 %v82
    %v140 = vunpack.c.h.b16 %v82
    %v141 = vunpack.c.l.b16 %v83
    %v142 = vunpack.c.h.b16 %v83
    %v143 = vunpack.c.l.b16 %v84
    %v144 = vunpack.c.h.b16 %v84
    %v145 = vunpack.c.l.b16 %v85
    %v146 = vunpack.c.h.b16 %v85
    %v147 = vunpack.c.l.b16 %v86
    %v148 = vunpack.c.h.b16 %v86
    %v149 = vpack.c.b16 %v119, %v117
    %v150 = vpack.c.b16 %v120, %v118
    %v151 = vpack.c.b16 %v123, %v121
    %v152 = vpack.c.b16 %v124, %v122
    %v153 = vpack.c.b16 %v127, %v125
    %v154 = vpack.c.b16 %v128, %v126
    %v155 = vpack.c.b16 %v131, %v129
    %v156 = vpack.c.b16 %v132, %v130
    %v157 = vpack.c.b16 %v135, %v133
    %v158 = vpack.c.b16 %v136, %v134
    %v159 = vpack.c.b16 %v139, %v137
    %v160 = vpack.c.b16 %v140, %v138
    %v161 = vpack.c.b16 %v143, %v141
    %v162 = vpack.c.b16 %v144, %v142
    %v163 = vpack.c.b16 %v147, %v145
    %v164 = vpack.c.b16 %v148, %v146
    %181 = vmatprep.subr.bf16.mxu0 %v164
    %182 = vmatpush1.bf16.xpose.msra.mxu0 %v163
    %183 = vmatprep.subr.bf16.mxu0 %v162
    %184 = vmatpush1.bf16.xpose.msra.mxu0 %v161
    %185 = vmatprep.subr.bf16.mxu0 %v160
    %186 = vmatpush1.bf16.xpose.msra.mxu0 %v159
    %187 = vmatprep.subr.bf16.mxu0 %v158
    %188 = vmatpush1.bf16.xpose.msra.mxu0 %v157
    %189 = vmatprep.subr.bf16.mxu0 %v156
    %190 = vmatpush1.bf16.xpose.msra.mxu0 %v155
    %191 = vmatprep.subr.bf16.mxu0 %v154
    %192 = vmatpush1.bf16.xpose.msra.mxu0 %v153
    %193 = vmatprep.subr.bf16.mxu0 %v152
    %194 = vmatpush1.bf16.xpose.msra.mxu0 %v151
    %195 = vmatprep.subr.bf16.mxu0 %v150
    %196 = vmatpush1.bf16.xpose.msra.mxu0 %v149
    %197 = vmatprep.subr.bf16.mxu0 0
    %198 = vmatpush2.bf16.xpose.msra.mxu0 0
    %199 = vmatprep.subr.bf16.mxu0 0
    %200 = vmatpush2.bf16.xpose.msra.mxu0 0
    %201 = vmatprep.subr.bf16.mxu0 0
    %202 = vmatpush2.bf16.xpose.msra.mxu0 0
    %203 = vmatprep.subr.bf16.mxu0 0
    %204 = vmatpush2.bf16.xpose.msra.mxu0 0
    %205 = vmatprep.subr.bf16.mxu0 0
    %206 = vmatpush2.bf16.xpose.msra.mxu0 0
    %207 = vmatprep.subr.bf16.mxu0 0
    %208 = vmatpush2.bf16.xpose.msra.mxu0 0
    %209 = vmatprep.subr.bf16.mxu0 0
    %210 = vmatpush2.bf16.xpose.msra.mxu0 0
    %211 = vmatprep.subr.bf16.mxu0 0
    %212 = vmatpush2.bf16.xpose.msra.mxu0 0
    %213 = vmatprep.mubr.bf16.mxu0 %v98
    %214 = vmatmul.mubr.bf16.gmra.mxu0 %v97
    %v215 = vpop.f32.mrf.mxu0
    %v216 = vadd.f32 %v92, %v215
    %v217 = vpop.f32.mrf.mxu0
    %v218 = vpop.f32.mrf.mxu0
    %v219 = vpop.f32.mrf.mxu0
    %220 = vdwg.mxu0
    %v221 = vxor.u32 %v216, 2147483648
    %v222 = vmul.f32 %v221, 1.442695
    %v223 = vpow.pop %v222
    %v224 = vadd.f32 %v223, 1.0
    %v225 = vrcp.pop %v224
    %v226 = vmul.f32 1.0, %v225
    %227 = vst [vmem:[#allocation10] sm:$0xff] %v226
    %v228 = vld [vmem:[#allocation2] sm:$0xff]
    %v229 = vld [vmem:[#allocation2 + $0x8] sm:$0xff]
    %v230 = vpack.c.bf16 %v226, %v226
    %v231 = vld [vmem:[#allocation8] sm:$0xf]
    %v232 = vld [vmem:[#allocation8 + $0x4] sm:$0xf]
    %v233 = vld [vmem:[#allocation8 + $0x8] sm:$0xf]
    %v234 = vld [vmem:[#allocation8 + $0xc] sm:$0xf]
    %v235 = vld [vmem:[#allocation8 + $0x10] sm:$0xf]
    %v236 = vld [vmem:[#allocation8 + $0x14] sm:$0xf]
    %v237 = vld [vmem:[#allocation8 + $0x18] sm:$0xf]
    %v238 = vld [vmem:[#allocation8 + $0x1c] sm:$0xf]
    %v239 = vld [vmem:[#allocation8 + $0x20] sm:$0xf]
    %v240 = vld [vmem:[#allocation8 + $0x24] sm:$0xf]
    %v241 = vld [vmem:[#allocation8 + $0x28] sm:$0xf]
    %v242 = vld [vmem:[#allocation8 + $0x2c] sm:$0xf]
    %v243 = vld [vmem:[#allocation8 + $0x30] sm:$0xf]
    %v244 = vld [vmem:[#allocation8 + $0x34] sm:$0xf]
    %v245 = vld [vmem:[#allocation8 + $0x38] sm:$0xf]
    %v246 = vld [vmem:[#allocation8 + $0x3c] sm:$0xf]
    %v247 = vld [vmem:[#allocation8 + $0x40] sm:$0xf]
    %v248 = vld [vmem:[#allocation8 + $0x44] sm:$0xf]
    %v249 = vld [vmem:[#allocation8 + $0x48] sm:$0xf]
    %v250 = vld [vmem:[#allocation8 + $0x4c] sm:$0xf]
    %v251 = vld [vmem:[#allocation8 + $0x50] sm:$0xf]
    %v252 = vld [vmem:[#allocation8 + $0x54] sm:$0xf]
    %v253 = vld [vmem:[#allocation8 + $0x58] sm:$0xf]
    %v254 = vld [vmem:[#allocation8 + $0x5c] sm:$0xf]
    %v255 = vld [vmem:[#allocation8 + $0x60] sm:$0xf]
    %v256 = vld [vmem:[#allocation8 + $0x64] sm:$0xf]
    %v257 = vld [vmem:[#allocation8 + $0x68] sm:$0xf]
    %v258 = vld [vmem:[#allocation8 + $0x6c] sm:$0xf]
    %v259 = vld [vmem:[#allocation8 + $0x70] sm:$0xf]
    %v260 = vld [vmem:[#allocation8 + $0x74] sm:$0xf]
    %v261 = vld [vmem:[#allocation8 + $0x78] sm:$0xf]
    %v262 = vld [vmem:[#allocation8 + $0x7c] sm:$0xf]
    %v295 = vunpack.c.l.b16 %v231
    %v296 = vunpack.c.l.b16 %v232
    %v297 = vunpack.c.l.b16 %v233
    %v298 = vunpack.c.l.b16 %v234
    %v299 = vunpack.c.l.b16 %v235
    %v300 = vunpack.c.l.b16 %v236
    %v301 = vunpack.c.l.b16 %v237
    %v302 = vunpack.c.l.b16 %v238
    %v303 = vunpack.c.l.b16 %v239
    %v304 = vunpack.c.l.b16 %v240
    %v305 = vunpack.c.l.b16 %v241
    %v306 = vunpack.c.l.b16 %v242
    %v307 = vunpack.c.l.b16 %v243
    %v308 = vunpack.c.l.b16 %v244
    %v309 = vunpack.c.l.b16 %v245
    %v310 = vunpack.c.l.b16 %v246
    %v311 = vunpack.c.l.b16 %v247
    %v312 = vunpack.c.l.b16 %v248
    %v313 = vunpack.c.l.b16 %v249
    %v314 = vunpack.c.l.b16 %v250
    %v315 = vunpack.c.l.b16 %v251
    %v316 = vunpack.c.l.b16 %v252
    %v317 = vunpack.c.l.b16 %v253
    %v318 = vunpack.c.l.b16 %v254
    %v319 = vunpack.c.l.b16 %v255
    %v320 = vunpack.c.l.b16 %v256
    %v321 = vunpack.c.l.b16 %v257
    %v322 = vunpack.c.l.b16 %v258
    %v323 = vunpack.c.l.b16 %v259
    %v324 = vunpack.c.l.b16 %v260
    %v325 = vunpack.c.l.b16 %v261
    %v326 = vunpack.c.l.b16 %v262
    %v327 = vpack.c.b16 %v296, %v295
    %v328 = vpack.c.b16 %v298, %v297
    %v329 = vpack.c.b16 %v300, %v299
    %v330 = vpack.c.b16 %v302, %v301
    %v331 = vpack.c.b16 %v304, %v303
    %v332 = vpack.c.b16 %v306, %v305
    %v333 = vpack.c.b16 %v308, %v307
    %v334 = vpack.c.b16 %v310, %v309
    %v335 = vpack.c.b16 %v312, %v311
    %v336 = vpack.c.b16 %v314, %v313
    %v337 = vpack.c.b16 %v316, %v315
    %v338 = vpack.c.b16 %v318, %v317
    %v339 = vpack.c.b16 %v320, %v319
    %v340 = vpack.c.b16 %v322, %v321
    %v341 = vpack.c.b16 %v324, %v323
    %v342 = vpack.c.b16 %v326, %v325
    %359 = vmatprep.subr.bf16.mxu0 0
    %360 = vmatpush1.bf16.xpose.msra.mxu0 %v334
    %361 = vmatprep.subr.bf16.mxu0 0
    %362 = vmatpush1.bf16.xpose.msra.mxu0 %v333
    %363 = vmatprep.subr.bf16.mxu0 0
    %364 = vmatpush1.bf16.xpose.msra.mxu0 %v332
    %365 = vmatprep.subr.bf16.mxu0 0
    %366 = vmatpush1.bf16.xpose.msra.mxu0 %v331
    %367 = vmatprep.subr.bf16.mxu0 0
    %368 = vmatpush1.bf16.xpose.msra.mxu0 %v330
    %369 = vmatprep.subr.bf16.mxu0 0
    %370 = vmatpush1.bf16.xpose.msra.mxu0 %v329
    %371 = vmatprep.subr.bf16.mxu0 0
    %372 = vmatpush1.bf16.xpose.msra.mxu0 %v328
    %373 = vmatprep.subr.bf16.mxu0 0
    %374 = vmatpush1.bf16.xpose.msra.mxu0 %v327
    %375 = vmatprep.subr.bf16.mxu0 0
    %376 = vmatpush2.bf16.xpose.msra.mxu0 %v342
    %377 = vmatprep.subr.bf16.mxu0 0
    %378 = vmatpush2.bf16.xpose.msra.mxu0 %v341
    %379 = vmatprep.subr.bf16.mxu0 0
    %380 = vmatpush2.bf16.xpose.msra.mxu0 %v340
    %381 = vmatprep.subr.bf16.mxu0 0
    %382 = vmatpush2.bf16.xpose.msra.mxu0 %v339
    %383 = vmatprep.subr.bf16.mxu0 0
    %384 = vmatpush2.bf16.xpose.msra.mxu0 %v338
    %385 = vmatprep.subr.bf16.mxu0 0
    %386 = vmatpush2.bf16.xpose.msra.mxu0 %v337
    %387 = vmatprep.subr.bf16.mxu0 0
    %388 = vmatpush2.bf16.xpose.msra.mxu0 %v336
    %389 = vmatprep.subr.bf16.mxu0 0
    %390 = vmatpush2.bf16.xpose.msra.mxu0 %v335
    %391 = vmatprep.mubr.bf16.mxu0 0
    %392 = vmatmul.mubr.bf16.gmra.mxu0 %v230
    %v393 = vpop.f32.mrf.mxu0
    %v394 = vadd.f32 0.0, %v393
    %v395 = vpop.f32.mrf.mxu0
    %v396 = vadd.f32 0.0, %v395
    %v397 = vpop.f32.mrf.mxu0
    %v398 = vpop.f32.mrf.mxu0
    %399 = vdwg.mxu0
    %v400 = vadd.f32 %v228, %v394
    %v401 = vadd.f32 %v229, %v396
    %402 = vst [vmem:[#allocation2] sm:$0xff] %v400
    %403 = vst [vmem:[#allocation2 + $0x8] sm:$0xff] %v401
    // Predicated region
    $region38: #{tpu_custom_call.1} parent=1 // pred_check
      %p404 = pneg %p64
    $region39: #{tpu_custom_call.1} parent=1 // pred_check_branch
      %406 = sbr.rel (%p404) target = $region41
    $region40: #{tpu_custom_call.1} parent=1 // pred_region
      %v407 = vld [vmem:[#allocation2] sm:$0xff]
      %v408 = vld [vmem:[#allocation2 + $0x8] sm:$0xff]
      %v409 = vld [vmem:[%s4] sm:$0x3]
      %v411 = vlaneseq
      %v412 = vshrl.u32 %v411, 7
      %v413 = vsub.s32 0, %v412
      %v414 = vrot.slane %v409, %v413
      %v415 = vlaneseq
      %v416 = vshrl.u32 %v415, 7
      %v417 = vsub.s32 1, %v416
      %v418 = vrot.slane %v409, %v417
      %v421 = vadd.f32 %v407, %v414
      %v422 = vadd.f32 %v408, %v418
      %v423 = vxor.u32 %v421, 2147483648
      %v424 = vxor.u32 %v422, 2147483648
      %v425 = vmul.f32 %v423, 1.442695
      %v426 = vpow.pop %v425
      %v427 = vmul.f32 %v424, 1.442695
      %v428 = vpow.pop %v427
      %v429 = vadd.f32 %v426, 1.0
      %v430 = vadd.f32 %v428, 1.0
      %v431 = vrcp.pop %v429
      %v432 = vmul.f32 1.0, %v431
      %v433 = vrcp.pop %v430
      %v434 = vmul.f32 1.0, %v433
      %435 = vst [vmem:[#allocation9] sm:$0xff] %v432
      %436 = vst [vmem:[#allocation9 + $0x8] sm:$0xff] %v434
    $region41: #{tpu_custom_call.1} parent=1 // pred_fallthru
      _
    // Predicated region
    $region42: #{tpu_custom_call.1} parent=1 // pred_check
      _
    $region43: #{tpu_custom_call.1} parent=1 // pred_check_branch
      %438 = sbr.rel (0) target = $region45
    $region44: #{tpu_custom_call.1} parent=1 // pred_region
      %s440 = ssub.s32 256, 256
      %441 = vsyncadd [#allocation5], %s440
      %s443 = sshll.u32 [#allocation9], 4
      %s444 = int_to_ptr.vmem [resolvable:$true] %s443
      %446 = dma.vmem_to_hbm [thread:$0]  %s444, 256, %s5, [#allocation5]
    $region45: #{tpu_custom_call.1} parent=1 // pred_fallthru
      _
    // Predicated region
    $region46: #{tpu_custom_call.1} parent=1 // pred_check
      _
    $region47: #{tpu_custom_call.1} parent=1 // pred_check_branch
      %448 = sbr.rel (0) target = $region49
    $region48: #{tpu_custom_call.1} parent=1 // pred_region
      %s450 = ssub.s32 128, 128
      %451 = vsyncadd [#allocation11], %s450
      %s453 = sshll.u32 [#allocation10], 4
      %s454 = int_to_ptr.vmem [resolvable:$true] %s453
      %456 = dma.vmem_to_hbm [thread:$0]  %s454, 128, %s6, [#allocation11]
    $region49: #{tpu_custom_call.1} parent=1 // pred_fallthru
      _
    // Predicated region
    $region50: #{tpu_custom_call.1} parent=1 // pred_check
      _
    $region51: #{tpu_custom_call.1} parent=1 // pred_check_branch
      %458 = sbr.rel (0) target = $region53
    $region52: #{tpu_custom_call.1} parent=1 // pred_region
      %459 = dma.done [#allocation5], 256
    $region53: #{tpu_custom_call.1} parent=1 // pred_fallthru
      _
    // Predicated region
    $region54: #{tpu_custom_call.1} parent=1 // pred_check
      _
    $region55: #{tpu_custom_call.1} parent=1 // pred_check_branch
      %461 = sbr.rel (0) target = $region57
    $region56: #{tpu_custom_call.1} parent=1 // pred_region
      %462 = dma.done [#allocation11], 128
    $region57: #{tpu_custom_call.1} parent=1 // pred_fallthru
      _
    %463 = vsyncpa [#allocation4], 1
    %464 = vsyncpa [#allocation7], 1
    %465 = vsyncpa [#allocation5], 1
    %466 = vsyncpa [#allocation11], 1

</llo_original>
